<compile_context>
chip_gen: v7x
topology: tpu7x:2x2x1
jax: 0.10.0
libtpu: 0.0.40
codegen_flags: <defaults>
</compile_context>

<pallas_src>
import jax
import jax.numpy as jnp
from jax.experimental import pallas as pl
from jax.experimental.pallas import tpu as pltpu


def _round_up(x, m):
    return (x + m - 1) // m * m


def _mockmodel_kernel(p_ref, wconv_ref, bconv_ref, wfc_ref, bfc_ref, out_ref):
    # p_ref:     (Bt, H*W, Kp)   im2col patches (lane dim = Kp, zero-padded K)
    # wconv_ref: (Kp, Cout)      conv weight flattened (dy, dx, cin) -> rows
    # bconv_ref: (1, Cout)       conv bias (f32)
    # wfc_ref:   (Cout, Np)      fc weight, classes zero-padded to Np lanes
    # bfc_ref:   (1, Np)         fc bias (f32), zero-padded
    # out_ref:   (Bt, 1, Np)     logits (padded classes)
    Bt, HW, Kp = p_ref.shape
    Cout = wconv_ref.shape[1]

    # 3x3 'same' conv == single im2col matmul, f32 accumulation on the MXU.
    x = p_ref[...].reshape(Bt * HW, Kp)
    acc = jnp.dot(x, wconv_ref[...], preferred_element_type=jnp.float32)

    # bias + ReLU
    acc = jnp.maximum(acc + bconv_ref[...], 0.0)

    # AdaptiveAvgPool2d((1,1)) == mean over all H*W spatial positions.
    pooled = jnp.mean(acc.reshape(Bt, HW, Cout), axis=1)          # (Bt, Cout) f32

    # Flatten (trivial) + Linear(Cout -> num_classes), classes padded to Np lanes.
    logits = jnp.dot(pooled.astype(wfc_ref.dtype), wfc_ref[...],
                     preferred_element_type=jnp.float32) + bfc_ref[...]

    out_ref[...] = logits[:, None, :].astype(out_ref.dtype)


def mockmodel_forward(x_nchw, wconv, bconv, wfc, bfc, *,
                      compute_dtype=jnp.bfloat16, bt=1):
    """x_nchw: (B, 3, H, W) f32.  wconv: (3,3,Cin,Cout) HWIO.  Returns (B, num_classes) f32."""
    B, Cin, H, W = x_nchw.shape
    kh, kw, _, Cout = wconv.shape
    num_classes = wfc.shape[1]
    assert (kh, kw) == (3, 3)
    assert B % bt == 0

    HW = H * W
    K = kh * kw * Cin
    Kp = _round_up(K, 32)            # pad contraction dim (27 -> 32)
    Np = _round_up(num_classes, 128)  # lane-dense output (10 -> 128)

    # --- plain-JAX glue: layout, im2col, lane-friendly padding ---
    x_nhwc = jnp.transpose(x_nchw, (0, 2, 3, 1)).astype(jnp.float32)
    x_pad = jnp.pad(x_nhwc, ((0, 0), (1, 1), (1, 1), (0, 0)))
    # im2col with (dy, dx, cin) ordering to match wconv.reshape(K, Cout)
    patches = jnp.concatenate(
        [x_pad[:, dy:dy + H, dx:dx + W, :] for dy in range(3) for dx in range(3)],
        axis=-1).reshape(B, HW, K)
    patches = jnp.pad(patches, ((0, 0), (0, 0), (0, Kp - K))).astype(compute_dtype)

    w2d = jnp.pad(wconv.reshape(K, Cout).astype(jnp.float32),
                  ((0, Kp - K), (0, 0))).astype(compute_dtype)
    bconv2 = bconv.reshape(1, Cout).astype(jnp.float32)
    wfc_p = jnp.pad(wfc.astype(jnp.float32),
                    ((0, 0), (0, Np - num_classes))).astype(compute_dtype)
    bfc_p = jnp.pad(bfc.astype(jnp.float32),
                    ((0, Np - num_classes),)).reshape(1, Np)

    out = pl.pallas_call(
        _mockmodel_kernel,
        out_shape=jax.ShapeDtypeStruct((B, 1, Np), jnp.float32),
        grid_spec=pltpu.PrefetchScalarGridSpec(
            num_scalar_prefetch=0,
            grid=(B // bt,),
            in_specs=[
                pl.BlockSpec((bt, HW, Kp), lambda b: (b, 0, 0)),
                pl.BlockSpec((Kp, Cout), lambda b: (0, 0)),
                pl.BlockSpec((1, Cout), lambda b: (0, 0)),
                pl.BlockSpec((Cout, Np), lambda b: (0, 0)),
                pl.BlockSpec((1, Np), lambda b: (0, 0)),
            ],
            out_specs=pl.BlockSpec((bt, 1, Np), lambda b: (b, 0, 0)),
        ),
        compiler_params=pltpu.CompilerParams(
            dimension_semantics=("parallel",)),   # batch axis shards across TCs on v7x
    )(patches, w2d, bconv2, wfc_p, bfc_p)

    return out[:, 0, :num_classes]


def mockmodel_reference(x_nchw, wconv, bconv, wfc, bfc):
    """Pure-JAX f32 reference (same math) for correctness checks."""
    x_nhwc = jnp.transpose(x_nchw, (0, 2, 3, 1))
    y = jax.lax.conv_general_dilated(
        x_nhwc, wconv, window_strides=(1, 1), padding="SAME",
        dimension_numbers=("NHWC", "HWIO", "NHWC"))
    y = jnp.maximum(y + bconv[None, None, None, :], 0.0)
    pooled = jnp.mean(y, axis=(1, 2))           # (B, Cout)
    return pooled @ wfc + bfc[None, :]          # (B, num_classes)


if __name__ == "__main__":
    B, Cin, H, W = 2, 3, 16, 16
    Cout = 64
    num_classes = 10

    key = jax.random.PRNGKey(0)
    kx, kwc, kbc, kwf, kbf = jax.random.split(key, 5)

    x = jax.random.normal(kx, (B, Cin, H, W), dtype=jnp.float32)
    # Deterministic synthetic parameters (shapes from the module __init__).
    wconv = jax.random.normal(kwc, (3, 3, Cin, Cout), dtype=jnp.float32) * 0.1  # HWIO
    bconv = jax.random.normal(kbc, (Cout,), dtype=jnp.float32) * 0.1
    wfc = jax.random.normal(kwf, (Cout, num_classes), dtype=jnp.float32) * 0.1
    bfc = jax.random.normal(kbf, (num_classes,), dtype=jnp.float32) * 0.1

    ref = jax.block_until_ready(mockmodel_reference(x, wconv, bconv, wfc, bfc))

    # Exact-precision path (f32 operands, f32 accumulation).
    out_f32 = jax.block_until_ready(
        mockmodel_forward(x, wconv, bconv, wfc, bfc, compute_dtype=jnp.float32))
    assert out_f32.shape == (B, num_classes)
    assert jnp.allclose(out_f32, ref, atol=1e-3, rtol=1e-3), "f32 mismatch vs reference"

    # Default fast path (bf16 operands, f32 accumulation) — per v6e/v7x MXU guidance.
    out_bf16 = jax.block_until_ready(
        mockmodel_forward(x, wconv, bconv, wfc, bfc))
    assert out_bf16.shape == (B, num_classes)
    assert jnp.allclose(out_bf16, ref, atol=2e-2, rtol=2e-2), "bf16 mismatch vs reference"

    print("KERNEL_OK")
</pallas_src>

<mosaic_0001>
module attributes {stable_mosaic.version = 11 : i64} {
  func.func @_mockmodel_kernel(%arg0: i32, %arg1: memref<1x256x32xf32, #tpu.memory_space<vmem>>, %arg2: memref<32x64xf32, #tpu.memory_space<vmem>>, %arg3: memref<1x64xf32, #tpu.memory_space<vmem>>, %arg4: memref<64x128xf32, #tpu.memory_space<vmem>>, %arg5: memref<1x128xf32, #tpu.memory_space<vmem>>, %arg6: memref<1x1x128xf32, #tpu.memory_space<vmem>>) attributes {dimension_semantics = [#tpu.dimension_semantics<parallel>], iteration_bounds = array<i64: 2>, scalar_prefetch = 0 : i64, scratch_operands = 0 : i64, tpu.core_type = #tpu.core_type<tc>, window_params = [{transform_indices = @transform_0, window_bounds = array<i64: 1, 256, 32>}, {pipeline_mode = #tpu.pipeline_mode<synchronous>, transform_indices = @transform_1, window_bounds = array<i64: 32, 64>}, {pipeline_mode = #tpu.pipeline_mode<synchronous>, transform_indices = @transform_2, window_bounds = array<i64: 1, 64>}, {pipeline_mode = #tpu.pipeline_mode<synchronous>, transform_indices = @transform_3, window_bounds = array<i64: 64, 128>}, {pipeline_mode = #tpu.pipeline_mode<synchronous>, transform_indices = @transform_4, window_bounds = array<i64: 1, 128>}, {transform_indices = @transform_5, window_bounds = array<i64: 1, 1, 128>}]} {
    %c0 = arith.constant 0 : index
    %c0_0 = arith.constant 0 : index
    %c0_1 = arith.constant 0 : index
    %0 = vector.load %arg1[%c0, %c0_0, %c0_1] : memref<1x256x32xf32, #tpu.memory_space<vmem>>, vector<1x256x32xf32>
    %1 = vector.shape_cast %0 : vector<1x256x32xf32> to vector<256x32xf32>
    %c0_2 = arith.constant 0 : index
    %c0_3 = arith.constant 0 : index
    %2 = vector.load %arg2[%c0_2, %c0_3] : memref<32x64xf32, #tpu.memory_space<vmem>>, vector<32x64xf32>
    %cst = arith.constant dense<0.000000e+00> : vector<256x64xf32>
    %3 = tpu.matmul %1, %2, %cst {dimension_numbers = #tpu.dot_dimension_numbers<[1], [0], [0], [1], [0, 0, 1, 1], [], []>} : vector<256x32xf32>, vector<32x64xf32>, vector<256x64xf32> -> vector<256x64xf32>
    %c0_4 = arith.constant 0 : index
    %c0_5 = arith.constant 0 : index
    %4 = vector.load %arg3[%c0_4, %c0_5] : memref<1x64xf32, #tpu.memory_space<vmem>>, vector<1x64xf32>
    %5 = vector.broadcast %4 : vector<1x64xf32> to vector<256x64xf32>
    %6 = arith.addf %3, %5 : vector<256x64xf32>
    %cst_6 = arith.constant 0.000000e+00 : f32
    %7 = vector.broadcast %cst_6 : f32 to vector<256x64xf32>
    %8 = arith.maximumf %6, %7 : vector<256x64xf32>
    %9 = vector.shape_cast %8 : vector<256x64xf32> to vector<1x256x64xf32>
    %cst_7 = arith.constant dense<0.000000e+00> : vector<1x64xf32>
    %10 = vector.multi_reduction <add>, %9, %cst_7 [1] : vector<1x256x64xf32> to vector<1x64xf32>
    %cst_8 = arith.constant 2.560000e+02 : f32
    %11 = vector.broadcast %cst_8 : f32 to vector<1x64xf32>
    %12 = arith.divf %10, %11 : vector<1x64xf32>
    %c0_9 = arith.constant 0 : index
    %c0_10 = arith.constant 0 : index
    %13 = vector.load %arg4[%c0_9, %c0_10] : memref<64x128xf32, #tpu.memory_space<vmem>>, vector<64x128xf32>
    %cst_11 = arith.constant dense<0.000000e+00> : vector<1x128xf32>
    %14 = tpu.matmul %12, %13, %cst_11 {dimension_numbers = #tpu.dot_dimension_numbers<[1], [0], [0], [1], [0, 0, 1, 1], [], []>} : vector<1x64xf32>, vector<64x128xf32>, vector<1x128xf32> -> vector<1x128xf32>
    %c0_12 = arith.constant 0 : index
    %c0_13 = arith.constant 0 : index
    %15 = vector.load %arg5[%c0_12, %c0_13] : memref<1x128xf32, #tpu.memory_space<vmem>>, vector<1x128xf32>
    %16 = arith.addf %14, %15 : vector<1x128xf32>
    %17 = vector.shape_cast %16 : vector<1x128xf32> to vector<1x1x128xf32>
    %c0_14 = arith.constant 0 : index
    %c0_15 = arith.constant 0 : index
    %c0_16 = arith.constant 0 : index
    %18 = vector.load %arg6[%c0_14, %c0_15, %c0_16] : memref<1x1x128xf32, #tpu.memory_space<vmem>>, vector<1x1x128xf32>
    tpu.vector_store %arg6[%c0_14, %c0_15, %c0_16], %17 {strides = array<i32>} : memref<1x1x128xf32, #tpu.memory_space<vmem>>, vector<1x1x128xf32>,
    return
  }
  func.func @transform_0(%arg0: i32) -> (i32, i32, i32) {
    %c0_i32 = arith.constant 0 : i32
    %c0_i32_0 = arith.constant 0 : i32
    %c0_i32_1 = arith.constant 0 : i32
    return %arg0, %c0_i32, %c0_i32_0 : i32, i32, i32
  }
  func.func @transform_1(%arg0: i32) -> (i32, i32) {
    %c0_i32 = arith.constant 0 : i32
    %c0_i32_0 = arith.constant 0 : i32
    %c0_i32_1 = arith.constant 0 : i32
    return %c0_i32, %c0_i32_0 : i32, i32
  }
  func.func @transform_2(%arg0: i32) -> (i32, i32) {
    %c0_i32 = arith.constant 0 : i32
    %c0_i32_0 = arith.constant 0 : i32
    %c0_i32_1 = arith.constant 0 : i32
    return %c0_i32, %c0_i32_0 : i32, i32
  }
  func.func @transform_3(%arg0: i32) -> (i32, i32) {
    %c0_i32 = arith.constant 0 : i32
    %c0_i32_0 = arith.constant 0 : i32
    %c0_i32_1 = arith.constant 0 : i32
    return %c0_i32, %c0_i32_0 : i32, i32
  }
  func.func @transform_4(%arg0: i32) -> (i32, i32) {
    %c0_i32 = arith.constant 0 : i32
    %c0_i32_0 = arith.constant 0 : i32
    %c0_i32_1 = arith.constant 0 : i32
    return %c0_i32, %c0_i32_0 : i32, i32
  }
  func.func @transform_5(%arg0: i32) -> (i32, i32, i32) {
    %c0_i32 = arith.constant 0 : i32
    %c0_i32_0 = arith.constant 0 : i32
    %c0_i32_1 = arith.constant 0 : i32
    return %arg0, %c0_i32, %c0_i32_0 : i32, i32, i32
  }
}

</mosaic_0001>

<llo_original>
// kernel: tpu_custom_call.1
$region0: #{tpu_custom_call.1}
  #allocation0 [shape = 'u32[]', space=smem, size = 0x4, offset = 0x4, fixed_abs, tag = 'smem constant byte address 0x4 - core index']
  #allocation1 [shape = 'u32[144,128]{1,0:T(1,128)}', space=vmem, size = 0x12000, scoped, tag = 'internal scratch']
  %s0 = inlined_call_operand.vmem [shape: f32[2,256,32], index: 0, kind: input, shape index: {}]
  %s1 = inlined_call_operand.vmem [shape: f32[32,64], index: 1, kind: input, shape index: {}]
  %s2 = inlined_call_operand.vmem [shape: f32[1,64], index: 2, kind: input, shape index: {}]
  %s3 = inlined_call_operand.vmem [shape: f32[64,128], index: 3, kind: input, shape index: {}]
  %s4 = inlined_call_operand.vmem [shape: f32[1,128], index: 4, kind: input, shape index: {}]
  %s5 = inlined_call_operand.hbm [shape: f32[2,1,128], index: 5, kind: output, shape index: {}]
  %s6 = sld [smem:[#allocation0]]
  $region53: #{tpu_custom_call.1} parent=0
    _
  %s8 = ssub.s32 1, %s6
  %s9 = scalar_select 0, %s8, %s6
  $region1: #{tpu_custom_call.1} parent=0
    #allocation2 [shape = 'u8[1024]{0}', space=vmem, size = 0x400, scoped, tag = 'output window, operand 0']
    #allocation3 [shape = 's32[2]{0}', space=sflag, size = 0x8, scoped, tag = 'scoped memory for tpu_custom_call.1']
    %10 = vsyncpa [#allocation3], 0
    %s11 = scalar_lea.sflag [#allocation3], 1
    %12 = vsyncpa %s11, 0
    loop: start=0, step=1, limit=4
    $region2: #{tpu_custom_call.1} parent=1 // loop_pre_header
      _
    $region3: #{tpu_custom_call.1} parent=1 // loop_header
      %s14 = sphi 0, %s18
      %p15 = scmp.ge.s32.totalorder %s14, 4
      %s24 = sphi 0, %s26
      %s27 = sphi 0, %s24
      %s28 = sphi 0, %s27
      %s44 = sphi 0, %s28
      %s48 = sphi 0, %s48
      %s50 = sphi 0, %s48
      %s51 = sphi 0, %s50
      %s65 = sphi 0, %s51
      %s69 = sphi 0, %s69
      %s71 = sphi 0, %s69
      %s72 = sphi 0, %s71
      %s86 = sphi 0, %s72
      %s90 = sphi 0, %s90
      %s92 = sphi 0, %s90
      %s93 = sphi 0, %s92
      %s107 = sphi 0, %s93
      %s111 = sphi 0, %s111
      %s113 = sphi 0, %s111
      %s114 = sphi 0, %s113
      %s128 = sphi 0, %s114
      %s134 = sphi 0, %s136
      %s137 = sphi 0, %s134
      %s138 = sphi 0, %s137
      %s154 = sphi 0, %s138
    $region4: #{tpu_custom_call.1} parent=1 // loop_header_branch
      %17 = sbr.rel (%p15) target = $region8
    $region5: #{tpu_custom_call.1} parent=1 // loop_body
      %s19 = ssub.s32 %s14, 1
      %s20 = ssub.s32 %s14, 2
      %s21 = sadd.s32 %s14, 1
      %s22 = ssub.s32 %s14, %s21
      %p23 = scmp.eq.s32.totalorder %s22, 0
      %s25 = sadd.s32 %s24, 1
      %s26 = scalar_select %p23, %s24, %s25
      %p29 = pneg %p23
      %p30 = scmp.eq.s32.totalorder %s14, 1
      %p31 = por %p29, %p30
      %p32 = scmp.ne.s32.totalorder %s24, %s27
      %p33 = scmp.eq.s32.totalorder %s14, 0
      %p34 = por %p32, %p33
      %p35 = scmp.ne.s32.totalorder %s24, %s27
      %p36 = scmp.eq.s32.totalorder %s19, 1
      %p37 = por %p35, %p36
      %p38 = scmp.ne.s32.totalorder %s27, %s28
      %p39 = scmp.eq.s32.totalorder %s19, 0
      %p40 = por %p38, %p39
      %p41 = scmp.ne.s32.totalorder %s27, %s28
      %p42 = scmp.eq.s32.totalorder %s20, 1
      %p43 = por %p41, %p42
      %p45 = scmp.ne.s32.totalorder %s28, %s44
      %p46 = scmp.eq.s32.totalorder %s20, 0
      %p47 = por %p45, %p46
      %s49 = sadd.s32 %s48, 1
      %p52 = scmp.eq.s32.totalorder %s14, 1
      %p53 = scmp.ne.s32.totalorder %s48, %s50
      %p54 = scmp.eq.s32.totalorder %s14, 0
      %p55 = por %p53, %p54
      %p56 = scmp.ne.s32.totalorder %s48, %s50
      %p57 = scmp.eq.s32.totalorder %s19, 1
      %p58 = por %p56, %p57
      %p59 = scmp.ne.s32.totalorder %s50, %s51
      %p60 = scmp.eq.s32.totalorder %s19, 0
      %p61 = por %p59, %p60
      %p62 = scmp.ne.s32.totalorder %s50, %s51
      %p63 = scmp.eq.s32.totalorder %s20, 1
      %p64 = por %p62, %p63
      %p66 = scmp.ne.s32.totalorder %s51, %s65
      %p67 = scmp.eq.s32.totalorder %s20, 0
      %p68 = por %p66, %p67
      %s70 = sadd.s32 %s69, 1
      %p73 = scmp.eq.s32.totalorder %s14, 1
      %p74 = scmp.ne.s32.totalorder %s69, %s71
      %p75 = scmp.eq.s32.totalorder %s14, 0
      %p76 = por %p74, %p75
      %p77 = scmp.ne.s32.totalorder %s69, %s71
      %p78 = scmp.eq.s32.totalorder %s19, 1
      %p79 = por %p77, %p78
      %p80 = scmp.ne.s32.totalorder %s71, %s72
      %p81 = scmp.eq.s32.totalorder %s19, 0
      %p82 = por %p80, %p81
      %p83 = scmp.ne.s32.totalorder %s71, %s72
      %p84 = scmp.eq.s32.totalorder %s20, 1
      %p85 = por %p83, %p84
      %p87 = scmp.ne.s32.totalorder %s72, %s86
      %p88 = scmp.eq.s32.totalorder %s20, 0
      %p89 = por %p87, %p88
      %s91 = sadd.s32 %s90, 1
      %p94 = scmp.eq.s32.totalorder %s14, 1
      %p95 = scmp.ne.s32.totalorder %s90, %s92
      %p96 = scmp.eq.s32.totalorder %s14, 0
      %p97 = por %p95, %p96
      %p98 = scmp.ne.s32.totalorder %s90, %s92
      %p99 = scmp.eq.s32.totalorder %s19, 1
      %p100 = por %p98, %p99
      %p101 = scmp.ne.s32.totalorder %s92, %s93
      %p102 = scmp.eq.s32.totalorder %s19, 0
      %p103 = por %p101, %p102
      %p104 = scmp.ne.s32.totalorder %s92, %s93
      %p105 = scmp.eq.s32.totalorder %s20, 1
      %p106 = por %p104, %p105
      %p108 = scmp.ne.s32.totalorder %s93, %s107
      %p109 = scmp.eq.s32.totalorder %s20, 0
      %p110 = por %p108, %p109
      %s112 = sadd.s32 %s111, 1
      %p115 = scmp.eq.s32.totalorder %s14, 1
      %p116 = scmp.ne.s32.totalorder %s111, %s113
      %p117 = scmp.eq.s32.totalorder %s14, 0
      %p118 = por %p116, %p117
      %p119 = scmp.ne.s32.totalorder %s111, %s113
      %p120 = scmp.eq.s32.totalorder %s19, 1
      %p121 = por %p119, %p120
      %p122 = scmp.ne.s32.totalorder %s113, %s114
      %p123 = scmp.eq.s32.totalorder %s19, 0
      %p124 = por %p122, %p123
      %p125 = scmp.ne.s32.totalorder %s113, %s114
      %p126 = scmp.eq.s32.totalorder %s20, 1
      %p127 = por %p125, %p126
      %p129 = scmp.ne.s32.totalorder %s114, %s128
      %p130 = scmp.eq.s32.totalorder %s20, 0
      %p131 = por %p129, %p130
      %s132 = ssub.s32 %s14, %s21
      %p133 = scmp.eq.s32.totalorder %s132, 0
      %s135 = sadd.s32 %s134, 1
      %s136 = scalar_select %p133, %s134, %s135
      %p139 = pneg %p133
      %p140 = scmp.eq.s32.totalorder %s14, 1
      %p141 = por %p139, %p140
      %p142 = scmp.ne.s32.totalorder %s134, %s137
      %p143 = scmp.eq.s32.totalorder %s14, 0
      %p144 = por %p142, %p143
      %p145 = scmp.ne.s32.totalorder %s134, %s137
      %p146 = scmp.eq.s32.totalorder %s19, 1
      %p147 = por %p145, %p146
      %p148 = scmp.ne.s32.totalorder %s137, %s138
      %p149 = scmp.eq.s32.totalorder %s19, 0
      %p150 = por %p148, %p149
      %p151 = scmp.ne.s32.totalorder %s137, %s138
      %p152 = scmp.eq.s32.totalorder %s20, 1
      %p153 = por %p151, %p152
      %p155 = scmp.ne.s32.totalorder %s138, %s154
      %p156 = scmp.eq.s32.totalorder %s20, 0
      %p157 = por %p155, %p156
      %p158 = scmp.le.s32.totalorder 1, %s14
      %p159 = scmp.lt.s32.totalorder %s14, 3
      %p160 = pnand %p158, %p159
      %p161 = pneg %p160
      // Predicated region
      $region9: #{tpu_custom_call.1} parent=5 // pred_check
        _
      $region10: #{tpu_custom_call.1} parent=5 // pred_check_branch
        %163 = sbr.rel (%p160) target = $region12
      $region11: #{tpu_custom_call.1} parent=5 // pred_region
        %s164 = ssub.s32 %s14, 1
        // Predicated region
        $region13: #{tpu_custom_call.1} parent=11 // pred_check
          %p165 = pneg %p61
        $region14: #{tpu_custom_call.1} parent=11 // pred_check_branch
          %167 = sbr.rel (%p165) target = $region16
        $region15: #{tpu_custom_call.1} parent=11 // pred_region
          _
        $region16: #{tpu_custom_call.1} parent=11 // pred_fallthru
          _
        // Predicated region
        $region17: #{tpu_custom_call.1} parent=11 // pred_check
          %p168 = pneg %p82
        $region18: #{tpu_custom_call.1} parent=11 // pred_check_branch
          %170 = sbr.rel (%p168) target = $region20
        $region19: #{tpu_custom_call.1} parent=11 // pred_region
          _
        $region20: #{tpu_custom_call.1} parent=11 // pred_fallthru
          _
        // Predicated region
        $region21: #{tpu_custom_call.1} parent=11 // pred_check
          %p171 = pneg %p103
        $region22: #{tpu_custom_call.1} parent=11 // pred_check_branch
          %173 = sbr.rel (%p171) target = $region24
        $region23: #{tpu_custom_call.1} parent=11 // pred_region
          _
        $region24: #{tpu_custom_call.1} parent=11 // pred_fallthru
          _
        // Predicated region
        $region25: #{tpu_custom_call.1} parent=11 // pred_check
          %p174 = pneg %p124
        $region26: #{tpu_custom_call.1} parent=11 // pred_check_branch
          %176 = sbr.rel (%p174) target = $region28
        $region27: #{tpu_custom_call.1} parent=11 // pred_region
          _
        $region28: #{tpu_custom_call.1} parent=11 // pred_fallthru
          _
      $region12: #{tpu_custom_call.1} parent=5 // pred_fallthru
        _
      %p177 = scmp.lt.s32.totalorder %s14, 2
      // Predicated region
      $region29: #{tpu_custom_call.1} parent=5 // pred_check
        %p178 = pneg %p177
      $region30: #{tpu_custom_call.1} parent=5 // pred_check_branch
        %180 = sbr.rel (%p178) target = $region32
      $region31: #{tpu_custom_call.1} parent=5 // pred_region
        // Predicated region
        $region33: #{tpu_custom_call.1} parent=31 // pred_check
          %p181 = pneg %p34
        $region34: #{tpu_custom_call.1} parent=31 // pred_check_branch
          %183 = sbr.rel (%p181) target = $region36
        $region35: #{tpu_custom_call.1} parent=31 // pred_region
          %p184 = scmp.lt.s32.totalorder %s14, 1
          %s185 = scalar_select %p184, %s14, 1
          %s186 = smul.addr %s185, 32
          %s187 = smul.addr %s186, 8
          %s188 = scalar_lea.vmem %s0, %s187
        $region36: #{tpu_custom_call.1} parent=31 // pred_fallthru
          _
      $region32: #{tpu_custom_call.1} parent=5 // pred_fallthru
        _
      %p189 = scmp.le.s32.totalorder 1, %s14
      %p190 = scmp.lt.s32.totalorder %s14, 3
      %p191 = pnand %p189, %p190
      %p192 = pneg %p191
      // Predicated region
      $region37: #{tpu_custom_call.1} parent=5 // pred_check
        _
      $region38: #{tpu_custom_call.1} parent=5 // pred_check_branch
        %194 = sbr.rel (%p191) target = $region40
      $region39: #{tpu_custom_call.1} parent=5 // pred_region
        %s195 = ssub.s32 %s14, 1
        %p196 = scmp.lt.s32.totalorder %s19, 1
        %s197 = scalar_select %p196, %s19, 1
        %s198 = smul.addr %s197, 32
        %s199 = smul.addr %s198, 8
        %s200 = scalar_lea.vmem %s0, %s199
        %p201 = pneg %p40
        %p202 = pneg %p37
        %p203 = pneg %p61
        %p204 = pneg %p58
        %p205 = pneg %p82
        %p206 = pneg %p79
        %p207 = pneg %p103
        %p208 = pneg %p100
        %p209 = pneg %p124
        %p210 = pneg %p121
        %p211 = pneg %p150
        %p212 = pneg %p147
        %s213 = sand.u32 %s137, 1
        %s214 = scalar_lea.sflag [#allocation3], %s213
        %s215 = sand.u32 %s137, 1
        %s216 = scalar_lea.vmem [#allocation2], %s215
        %p217 = scmp.lt.s32.totalorder %s19, 1
        %s218 = scalar_select %p217, %s19, 1
        %s219 = smul.addr %s218, 32
        %s220 = smul.addr %s219, 8
        %s221 = scalar_lea.vmem %s0, %s220
        %v222 = vld [vmem:[%s221] sm:$0xff]
        %v223 = vld [vmem:[%s221 + $0x8] sm:$0xff]
        %v224 = vld [vmem:[%s221 + $0x10] sm:$0xff]
        %v225 = vld [vmem:[%s221 + $0x18] sm:$0xff]
        %v226 = vld [vmem:[%s221 + $0x20] sm:$0xff]
        %v227 = vld [vmem:[%s221 + $0x28] sm:$0xff]
        %v228 = vld [vmem:[%s221 + $0x30] sm:$0xff]
        %v229 = vld [vmem:[%s221 + $0x38] sm:$0xff]
        %v230 = vld [vmem:[%s221 + $0x40] sm:$0xff]
        %v231 = vld [vmem:[%s221 + $0x48] sm:$0xff]
        %v232 = vld [vmem:[%s221 + $0x50] sm:$0xff]
        %v233 = vld [vmem:[%s221 + $0x58] sm:$0xff]
        %v234 = vld [vmem:[%s221 + $0x60] sm:$0xff]
        %v235 = vld [vmem:[%s221 + $0x68] sm:$0xff]
        %v236 = vld [vmem:[%s221 + $0x70] sm:$0xff]
        %v237 = vld [vmem:[%s221 + $0x78] sm:$0xff]
        %v238 = vld [vmem:[%s221 + $0x80] sm:$0xff]
        %v239 = vld [vmem:[%s221 + $0x88] sm:$0xff]
        %v240 = vld [vmem:[%s221 + $0x90] sm:$0xff]
        %v241 = vld [vmem:[%s221 + $0x98] sm:$0xff]
        %v242 = vld [vmem:[%s221 + $0xa0] sm:$0xff]
        %v243 = vld [vmem:[%s221 + $0xa8] sm:$0xff]
        %v244 = vld [vmem:[%s221 + $0xb0] sm:$0xff]
        %v245 = vld [vmem:[%s221 + $0xb8] sm:$0xff]
        %v246 = vld [vmem:[%s221 + $0xc0] sm:$0xff]
        %v247 = vld [vmem:[%s221 + $0xc8] sm:$0xff]
        %v248 = vld [vmem:[%s221 + $0xd0] sm:$0xff]
        %v249 = vld [vmem:[%s221 + $0xd8] sm:$0xff]
        %v250 = vld [vmem:[%s221 + $0xe0] sm:$0xff]
        %v251 = vld [vmem:[%s221 + $0xe8] sm:$0xff]
        %v252 = vld [vmem:[%s221 + $0xf0] sm:$0xff]
        %v253 = vld [vmem:[%s221 + $0xf8] sm:$0xff]
        %v254 = vld [vmem:[%s1] sm:$0xff]
        %v255 = vld [vmem:[%s1 + $0x8] sm:$0xff]
        %v256 = vld [vmem:[%s1 + $0x10] sm:$0xff]
        %v257 = vld [vmem:[%s1 + $0x18] sm:$0xff]
        %v258 = vld [vmem:[%s2] sm:$0x1]
        %v260 = vlaneseq
        %v261 = vshrl.u32 %v260, 7
        %v262 = vsub.s32 0, %v261
        %v263 = vrot.slane %v258, %v262
        %vm265 = vcmask 261120
        %v267 = vsel %vm265, %v222, 0
        %v270 = vsel %vm265, %v223, 0
        %v273 = vsel %vm265, %v224, 0
        %v276 = vsel %vm265, %v225, 0
        %v279 = vsel %vm265, %v226, 0
        %v282 = vsel %vm265, %v227, 0
        %v285 = vsel %vm265, %v228, 0
        %v288 = vsel %vm265, %v229, 0
        %v291 = vsel %vm265, %v230, 0
        %v294 = vsel %vm265, %v231, 0
        %v297 = vsel %vm265, %v232, 0
        %v300 = vsel %vm265, %v233, 0
        %v303 = vsel %vm265, %v234, 0
        %v306 = vsel %vm265, %v235, 0
        %v309 = vsel %vm265, %v236, 0
        %v312 = vsel %vm265, %v237, 0
        %v315 = vsel %vm265, %v238, 0
        %v318 = vsel %vm265, %v239, 0
        %v321 = vsel %vm265, %v240, 0
        %v324 = vsel %vm265, %v241, 0
        %v327 = vsel %vm265, %v242, 0
        %v330 = vsel %vm265, %v243, 0
        %v333 = vsel %vm265, %v244, 0
        %v336 = vsel %vm265, %v245, 0
        %v339 = vsel %vm265, %v246, 0
        %v342 = vsel %vm265, %v247, 0
        %v345 = vsel %vm265, %v248, 0
        %v348 = vsel %vm265, %v249, 0
        %v351 = vsel %vm265, %v250, 0
        %v354 = vsel %vm265, %v251, 0
        %v357 = vsel %vm265, %v252, 0
        %v360 = vsel %vm265, %v253, 0
        %362 = vmatprep.subr.mxu0 0.0
        %363 = vmatpush1.msra.mxu0 %v254
        %364 = vmatprep.subr.mxu0 0.0
        %365 = vmatpush1.msra.mxu0 %v255
        %366 = vmatprep.subr.mxu0 0.0
        %367 = vmatpush1.msra.mxu0 %v256
        %368 = vmatprep.subr.mxu0 0.0
        %369 = vmatpush1.msra.mxu0 %v257
        %370 = vmatprep.subr.mxu0 0.0
        %371 = vmatpush1.msra.mxu0 0.0
        %372 = vmatprep.subr.mxu0 0.0
        %373 = vmatpush1.msra.mxu0 0.0
        %374 = vmatprep.subr.mxu0 0.0
        %375 = vmatpush1.msra.mxu0 0.0
        %376 = vmatprep.subr.mxu0 0.0
        %377 = vmatpush1.msra.mxu0 0.0
        %378 = vmatprep.subr.mxu0 0.0
        %379 = vmatpush1.msra.mxu0 0.0
        %380 = vmatprep.subr.mxu0 0.0
        %381 = vmatpush1.msra.mxu0 0.0
        %382 = vmatprep.subr.mxu0 0.0
        %383 = vmatpush1.msra.mxu0 0.0
        %384 = vmatprep.subr.mxu0 0.0
        %385 = vmatpush1.msra.mxu0 0.0
        %386 = vmatprep.subr.mxu0 0.0
        %387 = vmatpush1.msra.mxu0 0.0
        %388 = vmatprep.subr.mxu0 0.0
        %389 = vmatpush1.msra.mxu0 0.0
        %390 = vmatprep.subr.mxu0 0.0
        %391 = vmatpush1.msra.mxu0 0.0
        %392 = vmatprep.subr.mxu0 0.0
        %393 = vmatpush1.msra.mxu0 0.0
        %394 = vmatprep.subr.mxu0 0.0
        %395 = vmatpush1.msra.mxu0 0.0
        %396 = vmatprep.subr.mxu0 0.0
        %397 = vmatpush1.msra.mxu0 0.0
        %398 = vmatprep.subr.mxu0 0.0
        %399 = vmatpush1.msra.mxu0 0.0
        %400 = vmatprep.subr.mxu0 0.0
        %401 = vmatpush1.msra.mxu0 0.0
        %402 = vmatprep.subr.mxu0 0.0
        %403 = vmatpush1.msra.mxu0 0.0
        %404 = vmatprep.subr.mxu0 0.0
        %405 = vmatpush1.msra.mxu0 0.0
        %406 = vmatprep.subr.mxu0 0.0
        %407 = vmatpush1.msra.mxu0 0.0
        %408 = vmatprep.subr.mxu0 0.0
        %409 = vmatpush1.msra.mxu0 0.0
        %410 = vmatprep.subr.mxu0 0.0
        %411 = vmatpush1.msra.mxu0 0.0
        %412 = vmatprep.subr.mxu0 0.0
        %413 = vmatpush1.msra.mxu0 0.0
        %414 = vmatprep.subr.mxu0 0.0
        %415 = vmatpush1.msra.mxu0 0.0
        %416 = vmatprep.subr.mxu0 0.0
        %417 = vmatpush1.msra.mxu0 0.0
        %418 = vmatprep.subr.mxu0 0.0
        %419 = vmatpush1.msra.mxu0 0.0
        %420 = vmatprep.subr.mxu0 0.0
        %421 = vmatpush1.msra.mxu0 0.0
        %422 = vmatprep.subr.mxu0 0.0
        %423 = vmatpush1.msra.mxu0 0.0
        %424 = vmatprep.subr.mxu0 0.0
        %425 = vmatpush1.msra.mxu0 0.0
        %426 = vmatprep.mubr.f32.mxu0 0.0
        %427 = vmatmul.mubr.f32.gmra.mrb[0].mxu0 %v267
        %v428 = vpop.f32.mrb[0].mxu0
        %v429 = vadd.f32 %v263, %v428
        %v430 = vpop.f32.mrb[0].mxu0
        %431 = vmatprep.mubr.f32.mxu0 0.0
        %432 = vmatmul.mubr.f32.gmra.mrb[0].mxu0 %v270
        %v433 = vpop.f32.mrb[0].mxu0
        %v434 = vadd.f32 %v263, %v433
        %v435 = vpop.f32.mrb[0].mxu0
        %436 = vmatprep.mubr.f32.mxu0 0.0
        %437 = vmatmul.mubr.f32.gmra.mrb[0].mxu0 %v273
        %v438 = vpop.f32.mrb[0].mxu0
        %v439 = vadd.f32 %v263, %v438
        %v440 = vpop.f32.mrb[0].mxu0
        %441 = vmatprep.mubr.f32.mxu0 0.0
        %442 = vmatmul.mubr.f32.gmra.mrb[0].mxu0 %v276
        %v443 = vpop.f32.mrb[0].mxu0
        %v444 = vadd.f32 %v263, %v443
        %v445 = vpop.f32.mrb[0].mxu0
        %446 = vmatprep.mubr.f32.mxu0 0.0
        %447 = vmatmul.mubr.f32.gmra.mrb[0].mxu0 %v279
        %v448 = vpop.f32.mrb[0].mxu0
        %v449 = vadd.f32 %v263, %v448
        %v450 = vpop.f32.mrb[0].mxu0
        %451 = vmatprep.mubr.f32.mxu0 0.0
        %452 = vmatmul.mubr.f32.gmra.mrb[0].mxu0 %v282
        %v453 = vpop.f32.mrb[0].mxu0
        %v454 = vadd.f32 %v263, %v453
        %v455 = vpop.f32.mrb[0].mxu0
        %456 = vmatprep.mubr.f32.mxu0 0.0
        %457 = vmatmul.mubr.f32.gmra.mrb[0].mxu0 %v285
        %v458 = vpop.f32.mrb[0].mxu0
        %v459 = vadd.f32 %v263, %v458
        %v460 = vpop.f32.mrb[0].mxu0
        %461 = vmatprep.mubr.f32.mxu0 0.0
        %462 = vmatmul.mubr.f32.gmra.mrb[0].mxu0 %v288
        %v463 = vpop.f32.mrb[0].mxu0
        %v464 = vadd.f32 %v263, %v463
        %v465 = vpop.f32.mrb[0].mxu0
        %466 = vmatprep.mubr.f32.mxu0 0.0
        %467 = vmatmul.mubr.f32.gmra.mrb[0].mxu0 %v291
        %v468 = vpop.f32.mrb[0].mxu0
        %v469 = vadd.f32 %v263, %v468
        %v470 = vpop.f32.mrb[0].mxu0
        %471 = vmatprep.mubr.f32.mxu0 0.0
        %472 = vmatmul.mubr.f32.gmra.mrb[0].mxu0 %v294
        %v473 = vpop.f32.mrb[0].mxu0
        %v474 = vadd.f32 %v263, %v473
        %v475 = vpop.f32.mrb[0].mxu0
        %476 = vmatprep.mubr.f32.mxu0 0.0
        %477 = vmatmul.mubr.f32.gmra.mrb[0].mxu0 %v297
        %v478 = vpop.f32.mrb[0].mxu0
        %v479 = vadd.f32 %v263, %v478
        %v480 = vpop.f32.mrb[0].mxu0
        %481 = vmatprep.mubr.f32.mxu0 0.0
        %482 = vmatmul.mubr.f32.gmra.mrb[0].mxu0 %v300
        %v483 = vpop.f32.mrb[0].mxu0
        %v484 = vadd.f32 %v263, %v483
        %v485 = vpop.f32.mrb[0].mxu0
        %486 = vmatprep.mubr.f32.mxu0 0.0
        %487 = vmatmul.mubr.f32.gmra.mrb[0].mxu0 %v303
        %v488 = vpop.f32.mrb[0].mxu0
        %v489 = vadd.f32 %v263, %v488
        %v490 = vpop.f32.mrb[0].mxu0
        %491 = vmatprep.mubr.f32.mxu0 0.0
        %492 = vmatmul.mubr.f32.gmra.mrb[0].mxu0 %v306
        %v493 = vpop.f32.mrb[0].mxu0
        %v494 = vadd.f32 %v263, %v493
        %v495 = vpop.f32.mrb[0].mxu0
        %496 = vmatprep.mubr.f32.mxu0 0.0
        %497 = vmatmul.mubr.f32.gmra.mrb[0].mxu0 %v309
        %v498 = vpop.f32.mrb[0].mxu0
        %v499 = vadd.f32 %v263, %v498
        %v500 = vpop.f32.mrb[0].mxu0
        %501 = vmatprep.mubr.f32.mxu0 0.0
        %502 = vmatmul.mubr.f32.gmra.mrb[0].mxu0 %v312
        %v503 = vpop.f32.mrb[0].mxu0
        %v504 = vadd.f32 %v263, %v503
        %v505 = vpop.f32.mrb[0].mxu0
        %506 = vmatprep.mubr.f32.mxu0 0.0
        %507 = vmatmul.mubr.f32.gmra.mrb[0].mxu0 %v315
        %v508 = vpop.f32.mrb[0].mxu0
        %v509 = vadd.f32 %v263, %v508
        %v510 = vpop.f32.mrb[0].mxu0
        %511 = vmatprep.mubr.f32.mxu0 0.0
        %512 = vmatmul.mubr.f32.gmra.mrb[0].mxu0 %v318
        %v513 = vpop.f32.mrb[0].mxu0
        %v514 = vadd.f32 %v263, %v513
        %v515 = vpop.f32.mrb[0].mxu0
        %516 = vmatprep.mubr.f32.mxu0 0.0
        %517 = vmatmul.mubr.f32.gmra.mrb[0].mxu0 %v321
        %v518 = vpop.f32.mrb[0].mxu0
        %v519 = vadd.f32 %v263, %v518
        %v520 = vpop.f32.mrb[0].mxu0
        %521 = vmatprep.mubr.f32.mxu0 0.0
        %522 = vmatmul.mubr.f32.gmra.mrb[0].mxu0 %v324
        %v523 = vpop.f32.mrb[0].mxu0
        %v524 = vadd.f32 %v263, %v523
        %v525 = vpop.f32.mrb[0].mxu0
        %526 = vmatprep.mubr.f32.mxu0 0.0
        %527 = vmatmul.mubr.f32.gmra.mrb[0].mxu0 %v327
        %v528 = vpop.f32.mrb[0].mxu0
        %v529 = vadd.f32 %v263, %v528
        %v530 = vpop.f32.mrb[0].mxu0
        %531 = vmatprep.mubr.f32.mxu0 0.0
        %532 = vmatmul.mubr.f32.gmra.mrb[0].mxu0 %v330
        %v533 = vpop.f32.mrb[0].mxu0
        %v534 = vadd.f32 %v263, %v533
        %v535 = vpop.f32.mrb[0].mxu0
        %536 = vmatprep.mubr.f32.mxu0 0.0
        %537 = vmatmul.mubr.f32.gmra.mrb[0].mxu0 %v333
        %v538 = vpop.f32.mrb[0].mxu0
        %v539 = vadd.f32 %v263, %v538
        %v540 = vpop.f32.mrb[0].mxu0
        %541 = vmatprep.mubr.f32.mxu0 0.0
        %542 = vmatmul.mubr.f32.gmra.mrb[0].mxu0 %v336
        %v543 = vpop.f32.mrb[0].mxu0
        %v544 = vadd.f32 %v263, %v543
        %v545 = vpop.f32.mrb[0].mxu0
        %546 = vmatprep.mubr.f32.mxu0 0.0
        %547 = vmatmul.mubr.f32.gmra.mrb[0].mxu0 %v339
        %v548 = vpop.f32.mrb[0].mxu0
        %v549 = vadd.f32 %v263, %v548
        %v550 = vpop.f32.mrb[0].mxu0
        %551 = vmatprep.mubr.f32.mxu0 0.0
        %552 = vmatmul.mubr.f32.gmra.mrb[0].mxu0 %v342
        %v553 = vpop.f32.mrb[0].mxu0
        %v554 = vadd.f32 %v263, %v553
        %v555 = vpop.f32.mrb[0].mxu0
        %556 = vmatprep.mubr.f32.mxu0 0.0
        %557 = vmatmul.mubr.f32.gmra.mrb[0].mxu0 %v345
        %v558 = vpop.f32.mrb[0].mxu0
        %v559 = vadd.f32 %v263, %v558
        %v560 = vpop.f32.mrb[0].mxu0
        %561 = vmatprep.mubr.f32.mxu0 0.0
        %562 = vmatmul.mubr.f32.gmra.mrb[0].mxu0 %v348
        %v563 = vpop.f32.mrb[0].mxu0
        %v564 = vadd.f32 %v263, %v563
        %v565 = vpop.f32.mrb[0].mxu0
        %566 = vmatprep.mubr.f32.mxu0 0.0
        %567 = vmatmul.mubr.f32.gmra.mrb[0].mxu0 %v351
        %v568 = vpop.f32.mrb[0].mxu0
        %v569 = vadd.f32 %v263, %v568
        %v570 = vpop.f32.mrb[0].mxu0
        %571 = vmatprep.mubr.f32.mxu0 0.0
        %572 = vmatmul.mubr.f32.gmra.mrb[0].mxu0 %v354
        %v573 = vpop.f32.mrb[0].mxu0
        %v574 = vadd.f32 %v263, %v573
        %v575 = vpop.f32.mrb[0].mxu0
        %576 = vmatprep.mubr.f32.mxu0 0.0
        %577 = vmatmul.mubr.f32.gmra.mrb[0].mxu0 %v357
        %v578 = vpop.f32.mrb[0].mxu0
        %v579 = vadd.f32 %v263, %v578
        %v580 = vpop.f32.mrb[0].mxu0
        %581 = vmatprep.mubr.f32.mxu0 0.0
        %582 = vmatmul.mubr.f32.gmra.mrb[0].mxu0 %v360
        %v583 = vpop.f32.mrb[0].mxu0
        %v584 = vadd.f32 %v263, %v583
        %v585 = vpop.f32.mrb[0].mxu0
        %586 = vdwg.mxu0
        %v587 = vmax.f32 %v429, 0.0
        %v588 = vmax.f32 %v434, 0.0
        %v589 = vmax.f32 %v439, 0.0
        %v590 = vmax.f32 %v444, 0.0
        %v591 = vmax.f32 %v449, 0.0
        %v592 = vmax.f32 %v454, 0.0
        %v593 = vmax.f32 %v459, 0.0
        %v594 = vmax.f32 %v464, 0.0
        %v595 = vmax.f32 %v469, 0.0
        %v596 = vmax.f32 %v474, 0.0
        %v597 = vmax.f32 %v479, 0.0
        %v598 = vmax.f32 %v484, 0.0
        %v599 = vmax.f32 %v489, 0.0
        %v600 = vmax.f32 %v494, 0.0
        %v601 = vmax.f32 %v499, 0.0
        %v602 = vmax.f32 %v504, 0.0
        %v603 = vmax.f32 %v509, 0.0
        %v604 = vmax.f32 %v514, 0.0
        %v605 = vmax.f32 %v519, 0.0
        %v606 = vmax.f32 %v524, 0.0
        %v607 = vmax.f32 %v529, 0.0
        %v608 = vmax.f32 %v534, 0.0
        %v609 = vmax.f32 %v539, 0.0
        %v610 = vmax.f32 %v544, 0.0
        %v611 = vmax.f32 %v549, 0.0
        %v612 = vmax.f32 %v554, 0.0
        %v613 = vmax.f32 %v559, 0.0
        %v614 = vmax.f32 %v564, 0.0
        %v615 = vmax.f32 %v569, 0.0
        %v616 = vmax.f32 %v574, 0.0
        %v617 = vmax.f32 %v579, 0.0
        %v618 = vmax.f32 %v584, 0.0
        %vm619 = vcmask 523264
        %v620 = vsel %vm619, %v587, 0.0
        %v621 = vsel %vm619, %v588, 0.0
        %v622 = vadd.f32 %v620, %v621
        %v623 = vsel %vm619, %v589, 0.0
        %v624 = vadd.f32 %v622, %v623
        %v625 = vsel %vm619, %v590, 0.0
        %v626 = vadd.f32 %v624, %v625
        %v627 = vsel %vm619, %v591, 0.0
        %v628 = vadd.f32 %v626, %v627
        %v629 = vsel %vm619, %v592, 0.0
        %v630 = vadd.f32 %v628, %v629
        %v631 = vsel %vm619, %v593, 0.0
        %v632 = vadd.f32 %v630, %v631
        %v633 = vsel %vm619, %v594, 0.0
        %v634 = vadd.f32 %v632, %v633
        %v635 = vsel %vm619, %v595, 0.0
        %v636 = vadd.f32 %v634, %v635
        %v637 = vsel %vm619, %v596, 0.0
        %v638 = vadd.f32 %v636, %v637
        %v639 = vsel %vm619, %v597, 0.0
        %v640 = vadd.f32 %v638, %v639
        %v641 = vsel %vm619, %v598, 0.0
        %v642 = vadd.f32 %v640, %v641
        %v643 = vsel %vm619, %v599, 0.0
        %v644 = vadd.f32 %v642, %v643
        %v645 = vsel %vm619, %v600, 0.0
        %v646 = vadd.f32 %v644, %v645
        %v647 = vsel %vm619, %v601, 0.0
        %v648 = vadd.f32 %v646, %v647
        %v649 = vsel %vm619, %v602, 0.0
        %v650 = vadd.f32 %v648, %v649
        %v651 = vsel %vm619, %v603, 0.0
        %v652 = vadd.f32 %v650, %v651
        %v653 = vsel %vm619, %v604, 0.0
        %v654 = vadd.f32 %v652, %v653
        %v655 = vsel %vm619, %v605, 0.0
        %v656 = vadd.f32 %v654, %v655
        %v657 = vsel %vm619, %v606, 0.0
        %v658 = vadd.f32 %v656, %v657
        %v659 = vsel %vm619, %v607, 0.0
        %v660 = vadd.f32 %v658, %v659
        %v661 = vsel %vm619, %v608, 0.0
        %v662 = vadd.f32 %v660, %v661
        %v663 = vsel %vm619, %v609, 0.0
        %v664 = vadd.f32 %v662, %v663
        %v665 = vsel %vm619, %v610, 0.0
        %v666 = vadd.f32 %v664, %v665
        %v667 = vsel %vm619, %v611, 0.0
        %v668 = vadd.f32 %v666, %v667
        %v669 = vsel %vm619, %v612, 0.0
        %v670 = vadd.f32 %v668, %v669
        %v671 = vsel %vm619, %v613, 0.0
        %v672 = vadd.f32 %v670, %v671
        %v673 = vsel %vm619, %v614, 0.0
        %v674 = vadd.f32 %v672, %v673
        %v675 = vsel %vm619, %v615, 0.0
        %v676 = vadd.f32 %v674, %v675
        %v677 = vsel %vm619, %v616, 0.0
        %v678 = vadd.f32 %v676, %v677
        %v679 = vsel %vm619, %v617, 0.0
        %v680 = vadd.f32 %v678, %v679
        %v681 = vsel %vm619, %v618, 0.0
        %v682 = vadd.f32 %v680, %v681
        %v683 = vrot.slane %v682, 4
        %v684 = vadd.f32 %v682, %v683
        %v685 = vrot.slane %v684, 2
        %v686 = vadd.f32 %v684, %v685
        %v687 = vrot.slane %v686, 1
        %v688 = vadd.f32 %v686, %v687
        %v689 = vrcp.pop 256.0
        %v690 = vmul.f32 %v688, %v689
        %v691 = vld [vmem:[%s3] sm:$0xff]
        %v692 = vld [vmem:[%s3 + $0x8] sm:$0xff]
        %v693 = vld [vmem:[%s3 + $0x10] sm:$0xff]
        %v694 = vld [vmem:[%s3 + $0x18] sm:$0xff]
        %v695 = vld [vmem:[%s3 + $0x20] sm:$0xff]
        %v696 = vld [vmem:[%s3 + $0x28] sm:$0xff]
        %v697 = vld [vmem:[%s3 + $0x30] sm:$0xff]
        %v698 = vld [vmem:[%s3 + $0x38] sm:$0xff]
        %v699 = vld [vmem:[%s4] sm:$0x1]
        %v701 = vsel %vm619, %v690, 0
        %703 = vmatprep.subr.mxu0 0.0
        %704 = vmatpush1.msra.mxu0 %v691
        %705 = vmatprep.subr.mxu0 0.0
        %706 = vmatpush1.msra.mxu0 %v692
        %707 = vmatprep.subr.mxu0 0.0
        %708 = vmatpush1.msra.mxu0 %v693
        %709 = vmatprep.subr.mxu0 0.0
        %710 = vmatpush1.msra.mxu0 %v694
        %711 = vmatprep.subr.mxu0 0.0
        %712 = vmatpush1.msra.mxu0 %v695
        %713 = vmatprep.subr.mxu0 0.0
        %714 = vmatpush1.msra.mxu0 %v696
        %715 = vmatprep.subr.mxu0 0.0
        %716 = vmatpush1.msra.mxu0 %v697
        %717 = vmatprep.subr.mxu0 0.0
        %718 = vmatpush1.msra.mxu0 %v698
        %719 = vmatprep.subr.mxu0 0.0
        %720 = vmatpush1.msra.mxu0 0.0
        %721 = vmatprep.subr.mxu0 0.0
        %722 = vmatpush1.msra.mxu0 0.0
        %723 = vmatprep.subr.mxu0 0.0
        %724 = vmatpush1.msra.mxu0 0.0
        %725 = vmatprep.subr.mxu0 0.0
        %726 = vmatpush1.msra.mxu0 0.0
        %727 = vmatprep.subr.mxu0 0.0
        %728 = vmatpush1.msra.mxu0 0.0
        %729 = vmatprep.subr.mxu0 0.0
        %730 = vmatpush1.msra.mxu0 0.0
        %731 = vmatprep.subr.mxu0 0.0
        %732 = vmatpush1.msra.mxu0 0.0
        %733 = vmatprep.subr.mxu0 0.0
        %734 = vmatpush1.msra.mxu0 0.0
        %735 = vmatprep.subr.mxu0 0.0
        %736 = vmatpush1.msra.mxu0 0.0
        %737 = vmatprep.subr.mxu0 0.0
        %738 = vmatpush1.msra.mxu0 0.0
        %739 = vmatprep.subr.mxu0 0.0
        %740 = vmatpush1.msra.mxu0 0.0
        %741 = vmatprep.subr.mxu0 0.0
        %742 = vmatpush1.msra.mxu0 0.0
        %743 = vmatprep.subr.mxu0 0.0
        %744 = vmatpush1.msra.mxu0 0.0
        %745 = vmatprep.subr.mxu0 0.0
        %746 = vmatpush1.msra.mxu0 0.0
        %747 = vmatprep.subr.mxu0 0.0
        %748 = vmatpush1.msra.mxu0 0.0
        %749 = vmatprep.subr.mxu0 0.0
        %750 = vmatpush1.msra.mxu0 0.0
        %751 = vmatprep.subr.mxu0 0.0
        %752 = vmatpush1.msra.mxu0 0.0
        %753 = vmatprep.subr.mxu0 0.0
        %754 = vmatpush1.msra.mxu0 0.0
        %755 = vmatprep.subr.mxu0 0.0
        %756 = vmatpush1.msra.mxu0 0.0
        %757 = vmatprep.subr.mxu0 0.0
        %758 = vmatpush1.msra.mxu0 0.0
        %759 = vmatprep.subr.mxu0 0.0
        %760 = vmatpush1.msra.mxu0 0.0
        %761 = vmatprep.subr.mxu0 0.0
        %762 = vmatpush1.msra.mxu0 0.0
        %763 = vmatprep.subr.mxu0 0.0
        %764 = vmatpush1.msra.mxu0 0.0
        %765 = vmatprep.subr.mxu0 0.0
        %766 = vmatpush1.msra.mxu0 0.0
        %767 = vmatprep.mubr.f32.mxu0 0.0
        %768 = vmatmul.mubr.f32.gmra.mrb[0].mxu0 %v701
        %v769 = vpop.f32.mrb[0].mxu0
        %v770 = vadd.f32 %v699, %v769
        %v771 = vpop.f32.mrb[0].mxu0
        %772 = vdwg.mxu0
        %773 = vst [vmem:[%s216] sm:$0x1] %v770
        %s774 = sand.u32 %s137, 1
        %s775 = scalar_lea.sflag [#allocation3], %s774
        %s776 = sand.u32 %s137, 1
        %s777 = scalar_lea.vmem [#allocation2], %s776
        // Predicated region
        $region41: #{tpu_custom_call.1} parent=39 // pred_check
          %p778 = pneg %p147
        $region42: #{tpu_custom_call.1} parent=39 // pred_check_branch
          %780 = sbr.rel (%p778) target = $region44
        $region43: #{tpu_custom_call.1} parent=39 // pred_region
          %s782 = ssub.s32 16, 16
          %783 = vsyncadd %s775, %s782
          %s784 = smul.addr %s19, 16
          %s785 = scalar_lea.hbm %s5, %s784
          %s787 = sshll.u32 %s777, 4
          %s788 = int_to_ptr.vmem [resolvable:$true] %s787
          %790 = dma.vmem_to_hbm [thread:$0]  %s788, 16, %s785, %s775
        $region44: #{tpu_custom_call.1} parent=39 // pred_fallthru
          _
      $region40: #{tpu_custom_call.1} parent=5 // pred_fallthru
        _
      %p791 = scmp.le.s32.totalorder 2, %s14
      // Predicated region
      $region45: #{tpu_custom_call.1} parent=5 // pred_check
        %p792 = pneg %p791
      $region46: #{tpu_custom_call.1} parent=5 // pred_check_branch
        %794 = sbr.rel (%p792) target = $region48
      $region47: #{tpu_custom_call.1} parent=5 // pred_region
        %s795 = ssub.s32 %s14, 2
        // Predicated region
        $region49: #{tpu_custom_call.1} parent=47 // pred_check
          %p796 = pneg %p153
        $region50: #{tpu_custom_call.1} parent=47 // pred_check_branch
          %798 = sbr.rel (%p796) target = $region52
        $region51: #{tpu_custom_call.1} parent=47 // pred_region
          %s799 = sand.u32 %s138, 1
          %s800 = scalar_lea.sflag [#allocation3], %s799
          %s801 = sand.u32 %s138, 1
          %s802 = scalar_lea.vmem [#allocation2], %s801
          %803 = dma.done %s800, 16
        $region52: #{tpu_custom_call.1} parent=47 // pred_fallthru
          _
      $region48: #{tpu_custom_call.1} parent=5 // pred_fallthru
        _
    $region6: #{tpu_custom_call.1} parent=1 // loop_footer
      %s18 = sadd.s32 1, %s14
    $region7: #{tpu_custom_call.1} parent=1 // loop_footer_branch
      %13 = sbr.rel target = $region3
    $region8: #{tpu_custom_call.1} parent=1 // loop_exit
      _
    %804 = vsyncpa [#allocation3], 1
    %s805 = scalar_lea.sflag [#allocation3], 1
    %806 = vsyncpa %s805, 1

</llo_original>
